<compile_context>
chip_gen: v7x
topology: tpu7x:2x2x1
jax: 0.10.0
libtpu: 0.0.40
codegen_flags: <defaults>
</compile_context>

<pallas_src>
import jax
import jax.numpy as jnp
from jax.experimental import pallas as pl
from jax.experimental.pallas import tpu as pltpu


def _feature_correlation_kernel(a_ref, b_ref, o_ref):
    # a_ref: (1, hw, c)      -- resident across the j grid axis
    # b_ref: (1, c, tile_j)
    # o_ref: (1, hw, tile_j) -- M_T[b, i, j] for this (batch, j-tile), final layout
    m = jnp.dot(a_ref[0], b_ref[0], preferred_element_type=jnp.float32)
    m = jnp.maximum(m, 0.0)  # ReLU
    # featureL2Norm over the correlation-channel axis i (axis 0 of the block).
    # rsqrt runs on the EUP; the per-element divide becomes a VPU multiply.
    inv = jax.lax.rsqrt(jnp.sum(m * m, axis=0, keepdims=True) + 1e-6)
    o_ref[0] = (m * inv).astype(o_ref.dtype)


def _pick_tile_j(hw, c_eff, in_itemsize):
    """Largest lane-dense (multiple-of-128) tile that divides hw and fits VMEM."""
    if hw < 128:
        return hw  # small maps: one full-width block (full-dim exemption)
    budget = 40 << 20  # stay well under v7x's 64 MiB VMEM after double-buffering
    for t in (512, 384, 256, 128):
        if hw % t == 0:
            est = (2 * (hw * t * 4 + c_eff * t * in_itemsize)
                   + 2 * hw * c_eff * in_itemsize)
            if est <= budget:
                return t
    return hw  # ragged hw: fall back to one full-width block per batch


def feature_correlation(feature_A, feature_B, *, tile_j=None, compute_dtype=None):
    """feature_A, feature_B: NCHW (b, c, h, w). Returns (b, h*w, h, w) float32."""
    b, c, h, w = feature_A.shape
    hw = h * w

    # Glue (matches torch's flattening orders):
    #   A_mk[b, i, c] with i = wA*h + hA  (torch: A.transpose(2,3).view(b,c,hw), T'd)
    #   B_km[b, c, j] with j = hB*w + wB  (torch: B.view(b,c,hw))  -> free reshape
    A_mk = jnp.transpose(feature_A, (0, 3, 2, 1)).reshape(b, hw, c)
    B_km = feature_B.reshape(b, c, hw)

    # Zero-pad channels to a sublane multiple (exact for the dot product).
    c_pad = (-c) % 8
    if c_pad:
        A_mk = jnp.pad(A_mk, ((0, 0), (0, 0), (0, c_pad)))
        B_km = jnp.pad(B_km, ((0, 0), (0, c_pad), (0, 0)))
    c_eff = c + c_pad

    if compute_dtype is not None:
        A_mk = A_mk.astype(compute_dtype)
        B_km = B_km.astype(compute_dtype)
    in_itemsize = jnp.dtype(A_mk.dtype).itemsize

    if tile_j is None:
        tile_j = _pick_tile_j(hw, c_eff, in_itemsize)
    assert hw % tile_j == 0, f"tile_j={tile_j} must divide hw={hw}"
    n_j = hw // tile_j

    # Scoped-VMEM: double-buffered A/B/out tiles + headroom, capped for v7x (64 MiB).
    est = 2 * (hw * c_eff * in_itemsize + c_eff * tile_j * in_itemsize
               + hw * tile_j * 4)
    vmem_limit = int(min(max(est + (4 << 20), 32 << 20), 48 << 20))

    m_t = pl.pallas_call(
        _feature_correlation_kernel,
        out_shape=jax.ShapeDtypeStruct((b, hw, hw), jnp.float32),
        grid_spec=pltpu.PrefetchScalarGridSpec(
            num_scalar_prefetch=0,
            grid=(b, n_j),
            in_specs=[
                pl.BlockSpec((1, hw, c_eff), lambda bi, ji: (bi, 0, 0)),     # resident A
                pl.BlockSpec((1, c_eff, tile_j), lambda bi, ji: (bi, 0, ji)),
            ],
            out_specs=pl.BlockSpec((1, hw, tile_j), lambda bi, ji: (bi, 0, ji)),
        ),
        compiler_params=pltpu.CompilerParams(
            dimension_semantics=("parallel", "parallel"),
            vmem_limit_bytes=vmem_limit,
        ),
    )(A_mk, B_km)

    # m_t[b, i, j] is already the final memory layout: free reshape only.
    return m_t.reshape(b, hw, h, w)


def _reference(feature_A, feature_B):
    """Pure-JAX reference mirroring the PyTorch forward exactly."""
    b, c, h, w = feature_A.shape
    hw = h * w
    A_km = jnp.transpose(feature_A, (0, 1, 3, 2)).reshape(b, c, hw)
    B_mk = jnp.transpose(feature_B.reshape(b, c, hw), (0, 2, 1))
    m = jnp.einsum("bjc,bci->bji", B_mk, A_km)
    corr = jnp.transpose(m, (0, 2, 1)).reshape(b, hw, h, w)
    corr = jnp.maximum(corr, 0.0)
    norm = jnp.sqrt(jnp.sum(corr * corr, axis=1, keepdims=True) + 1e-6)
    return corr / norm


if __name__ == "__main__":
    key = jax.random.PRNGKey(0)
    k1, k2, k3, k4 = jax.random.split(key, 4)

    # Case 1: tiny feature map (hw < 128 -> single full-width block per batch).
    fa = jax.random.normal(k1, (2, 4, 8, 8), dtype=jnp.float32)
    fb = jax.random.normal(k2, (2, 4, 8, 8), dtype=jnp.float32)
    out = feature_correlation(fa, fb)
    jax.block_until_ready(out)
    ref = _reference(fa, fb)
    assert out.shape == (2, 64, 8, 8)
    assert jnp.allclose(out, ref, atol=1e-4, rtol=1e-4), "mismatch (small case)"

    # Case 2: larger map with explicit j-tiling (exercises resident-A + 2 j-tiles).
    fa2 = jax.random.normal(k3, (2, 8, 16, 16), dtype=jnp.float32)
    fb2 = jax.random.normal(k4, (2, 8, 16, 16), dtype=jnp.float32)
    out2 = feature_correlation(fa2, fb2, tile_j=128)
    jax.block_until_ready(out2)
    ref2 = _reference(fa2, fb2)
    assert out2.shape == (2, 256, 16, 16)
    assert jnp.allclose(out2, ref2, atol=1e-4, rtol=1e-4), "mismatch (tiled case)"

    # Case 3: bf16 input path (f32 MXU accumulation), looser tolerance.
    out3 = feature_correlation(fa2, fb2, tile_j=128, compute_dtype=jnp.bfloat16)
    jax.block_until_ready(out3)
    assert jnp.allclose(out3, ref2, atol=3e-2, rtol=3e-2), "mismatch (bf16 case)"

    print("KERNEL_OK")
</pallas_src>

<mosaic_0001>
module attributes {stable_mosaic.version = 11 : i64} {
  func.func @_feature_correlation_kernel(%arg0: i32, %arg1: i32, %arg2: memref<1x64x8xf32, #tpu.memory_space<vmem>>, %arg3: memref<1x8x64xf32, #tpu.memory_space<vmem>>, %arg4: memref<1x64x64xf32, #tpu.memory_space<vmem>>) attributes {dimension_semantics = [#tpu.dimension_semantics<parallel>, #tpu.dimension_semantics<parallel>], iteration_bounds = array<i64: 2, 1>, scalar_prefetch = 0 : i64, scratch_operands = 0 : i64, tpu.core_type = #tpu.core_type<tc>, window_params = [{transform_indices = @transform_0, window_bounds = array<i64: 1, 64, 8>}, {transform_indices = @transform_1, window_bounds = array<i64: 1, 8, 64>}, {transform_indices = @transform_2, window_bounds = array<i64: 1, 64, 64>}]} {
    %c0 = arith.constant 0 : index
    %c0_0 = arith.constant 0 : index
    %c0_1 = arith.constant 0 : index
    %0 = vector.load %arg2[%c0, %c0_0, %c0_1] : memref<1x64x8xf32, #tpu.memory_space<vmem>>, vector<1x64x8xf32>
    %1 = vector.shape_cast %0 : vector<1x64x8xf32> to vector<64x8xf32>
    %c0_2 = arith.constant 0 : index
    %c0_3 = arith.constant 0 : index
    %c0_4 = arith.constant 0 : index
    %2 = vector.load %arg3[%c0_2, %c0_3, %c0_4] : memref<1x8x64xf32, #tpu.memory_space<vmem>>, vector<1x8x64xf32>
    %3 = vector.shape_cast %2 : vector<1x8x64xf32> to vector<8x64xf32>
    %cst = arith.constant dense<0.000000e+00> : vector<64x64xf32>
    %4 = tpu.matmul %1, %3, %cst {dimension_numbers = #tpu.dot_dimension_numbers<[1], [0], [0], [1], [0, 0, 1, 1], [], []>} : vector<64x8xf32>, vector<8x64xf32>, vector<64x64xf32> -> vector<64x64xf32>
    %cst_5 = arith.constant 0.000000e+00 : f32
    %5 = vector.broadcast %cst_5 : f32 to vector<64x64xf32>
    %6 = arith.maximumf %4, %5 : vector<64x64xf32>
    %7 = arith.mulf %6, %6 : vector<64x64xf32>
    %cst_6 = arith.constant dense<0.000000e+00> : vector<64xf32>
    %8 = vector.multi_reduction <add>, %7, %cst_6 [0] : vector<64x64xf32> to vector<64xf32>
    %9 = vector.shape_cast %8 : vector<64xf32> to vector<1x64xf32>
    %cst_7 = arith.constant 9.99999997E-7 : f32
    %10 = vector.broadcast %cst_7 : f32 to vector<1x64xf32>
    %11 = arith.addf %9, %10 : vector<1x64xf32>
    %12 = math.rsqrt %11 : vector<1x64xf32>
    %13 = vector.broadcast %12 : vector<1x64xf32> to vector<64x64xf32>
    %14 = arith.mulf %6, %13 : vector<64x64xf32>
    %c0_8 = arith.constant 0 : index
    %c0_9 = arith.constant 0 : index
    %c0_10 = arith.constant 0 : index
    %15 = vector.load %arg4[%c0_8, %c0_9, %c0_10] : memref<1x64x64xf32, #tpu.memory_space<vmem>>, vector<1x64x64xf32>
    %16 = vector.shape_cast %15 : vector<1x64x64xf32> to vector<64x64xf32>
    %17 = vector.shape_cast %14 : vector<64x64xf32> to vector<1x64x64xf32>
    tpu.vector_store %arg4[%c0_8, %c0_9, %c0_10], %17 {strides = array<i32>} : memref<1x64x64xf32, #tpu.memory_space<vmem>>, vector<1x64x64xf32>,
    return
  }
  func.func @transform_0(%arg0: i32, %arg1: i32) -> (i32, i32, i32) {
    %c0_i32 = arith.constant 0 : i32
    %c0_i32_0 = arith.constant 0 : i32
    %c0_i32_1 = arith.constant 0 : i32
    return %arg0, %c0_i32, %c0_i32_0 : i32, i32, i32
  }
  func.func @transform_1(%arg0: i32, %arg1: i32) -> (i32, i32, i32) {
    %c0_i32 = arith.constant 0 : i32
    %c0_i32_0 = arith.constant 0 : i32
    return %arg0, %c0_i32, %arg1 : i32, i32, i32
  }
  func.func @transform_2(%arg0: i32, %arg1: i32) -> (i32, i32, i32) {
    %c0_i32 = arith.constant 0 : i32
    %c0_i32_0 = arith.constant 0 : i32
    return %arg0, %c0_i32, %arg1 : i32, i32, i32
  }
}

</mosaic_0001>

<llo_original>
// kernel: tpu_custom_call.1
$region0: #{tpu_custom_call.1}
  #allocation0 [shape = 'u32[]', space=smem, size = 0x4, offset = 0x4, fixed_abs, tag = 'smem constant byte address 0x4 - core index']
  #allocation1 [shape = 'u32[144,128]{1,0:T(1,128)}', space=vmem, size = 0x12000, scoped, tag = 'internal scratch']
  %s0 = inlined_call_operand.vmem [shape: f32[2,64,8], index: 0, kind: input, shape index: {}]
  %s1 = inlined_call_operand.vmem [shape: f32[2,8,64], index: 1, kind: input, shape index: {}]
  %s2 = inlined_call_operand.hbm [shape: f32[2,64,64], index: 2, kind: output, shape index: {}]
  %s3 = sld [smem:[#allocation0]]
  $region41: #{tpu_custom_call.1} parent=0
    _
  %s5 = ssub.s32 1, %s3
  %s6 = scalar_select 0, %s5, %s3
  $region1: #{tpu_custom_call.1} parent=0
    #allocation2 [shape = 'u8[65536]{0}', space=vmem, size = 0x10000, scoped, tag = 'output window, operand 0']
    #allocation3 [shape = 's32[2]{0}', space=sflag, size = 0x8, scoped, tag = 'scoped memory for tpu_custom_call.1']
    %7 = vsyncpa [#allocation3], 0
    %s8 = scalar_lea.sflag [#allocation3], 1
    %9 = vsyncpa %s8, 0
    loop: start=0, step=1, limit=4
    $region2: #{tpu_custom_call.1} parent=1 // loop_pre_header
      _
    $region3: #{tpu_custom_call.1} parent=1 // loop_header
      %s11 = sphi 0, %s15
      %p12 = scmp.ge.s32.totalorder %s11, 4
      %s18 = sphi 0, %s30
      %s19 = sphi 0, %s26
      %s20 = sphi 0, %s18
      %s21 = sphi 0, %s19
      %s22 = sphi 0, %s20
      %s23 = sphi 0, %s21
      %s33 = sphi 0, %s35
      %s36 = sphi 0, %s33
      %s37 = sphi 0, %s36
      %s53 = sphi 0, %s37
      %s61 = sphi 0, %s63
      %s64 = sphi 0, %s61
      %s65 = sphi 0, %s64
      %s81 = sphi 0, %s65
      %s89 = sphi 0, %s91
      %s92 = sphi 0, %s89
      %s93 = sphi 0, %s92
      %s109 = sphi 0, %s93
    $region4: #{tpu_custom_call.1} parent=1 // loop_header_branch
      %14 = sbr.rel (%p12) target = $region8
    $region5: #{tpu_custom_call.1} parent=1 // loop_body
      %s16 = ssub.s32 %s11, 1
      %s17 = ssub.s32 %s11, 2
      %s24 = sadd.s32 1, %s19
      %p25 = scmp.ge.s32.totalorder %s24, 1
      %s26 = scalar_select %p25, 0, %s24
      %s27 = sadd.s32 1, %s18
      %s28 = scalar_select %p25, %s27, %s18
      %p29 = scmp.ge.s32.totalorder %s28, 2
      %s30 = scalar_select %p29, 0, %s28
      %s31 = ssub.s32 %s18, %s30
      %p32 = scmp.eq.s32.totalorder %s31, 0
      %s34 = sadd.s32 %s33, 1
      %s35 = scalar_select %p32, %s33, %s34
      %p38 = pneg %p32
      %p39 = scmp.eq.s32.totalorder %s11, 1
      %p40 = por %p38, %p39
      %p41 = scmp.ne.s32.totalorder %s33, %s36
      %p42 = scmp.eq.s32.totalorder %s11, 0
      %p43 = por %p41, %p42
      %p44 = scmp.ne.s32.totalorder %s33, %s36
      %p45 = scmp.eq.s32.totalorder %s16, 1
      %p46 = por %p44, %p45
      %p47 = scmp.ne.s32.totalorder %s36, %s37
      %p48 = scmp.eq.s32.totalorder %s16, 0
      %p49 = por %p47, %p48
      %p50 = scmp.ne.s32.totalorder %s36, %s37
      %p51 = scmp.eq.s32.totalorder %s17, 1
      %p52 = por %p50, %p51
      %p54 = scmp.ne.s32.totalorder %s37, %s53
      %p55 = scmp.eq.s32.totalorder %s17, 0
      %p56 = por %p54, %p55
      %s57 = ssub.s32 %s18, %s30
      %s58 = ssub.s32 %s19, %s26
      %s59 = sor.u32 %s57, %s58
      %p60 = scmp.eq.s32.totalorder %s59, 0
      %s62 = sadd.s32 %s61, 1
      %s63 = scalar_select %p60, %s61, %s62
      %p66 = pneg %p60
      %p67 = scmp.eq.s32.totalorder %s11, 1
      %p68 = por %p66, %p67
      %p69 = scmp.ne.s32.totalorder %s61, %s64
      %p70 = scmp.eq.s32.totalorder %s11, 0
      %p71 = por %p69, %p70
      %p72 = scmp.ne.s32.totalorder %s61, %s64
      %p73 = scmp.eq.s32.totalorder %s16, 1
      %p74 = por %p72, %p73
      %p75 = scmp.ne.s32.totalorder %s64, %s65
      %p76 = scmp.eq.s32.totalorder %s16, 0
      %p77 = por %p75, %p76
      %p78 = scmp.ne.s32.totalorder %s64, %s65
      %p79 = scmp.eq.s32.totalorder %s17, 1
      %p80 = por %p78, %p79
      %p82 = scmp.ne.s32.totalorder %s65, %s81
      %p83 = scmp.eq.s32.totalorder %s17, 0
      %p84 = por %p82, %p83
      %s85 = ssub.s32 %s18, %s30
      %s86 = ssub.s32 %s19, %s26
      %s87 = sor.u32 %s85, %s86
      %p88 = scmp.eq.s32.totalorder %s87, 0
      %s90 = sadd.s32 %s89, 1
      %s91 = scalar_select %p88, %s89, %s90
      %p94 = pneg %p88
      %p95 = scmp.eq.s32.totalorder %s11, 1
      %p96 = por %p94, %p95
      %p97 = scmp.ne.s32.totalorder %s89, %s92
      %p98 = scmp.eq.s32.totalorder %s11, 0
      %p99 = por %p97, %p98
      %p100 = scmp.ne.s32.totalorder %s89, %s92
      %p101 = scmp.eq.s32.totalorder %s16, 1
      %p102 = por %p100, %p101
      %p103 = scmp.ne.s32.totalorder %s92, %s93
      %p104 = scmp.eq.s32.totalorder %s16, 0
      %p105 = por %p103, %p104
      %p106 = scmp.ne.s32.totalorder %s92, %s93
      %p107 = scmp.eq.s32.totalorder %s17, 1
      %p108 = por %p106, %p107
      %p110 = scmp.ne.s32.totalorder %s93, %s109
      %p111 = scmp.eq.s32.totalorder %s17, 0
      %p112 = por %p110, %p111
      %p113 = scmp.le.s32.totalorder 1, %s11
      %p114 = scmp.lt.s32.totalorder %s11, 3
      %p115 = pnand %p113, %p114
      %p116 = pneg %p115
      // Predicated region
      $region9: #{tpu_custom_call.1} parent=5 // pred_check
        _
      $region10: #{tpu_custom_call.1} parent=5 // pred_check_branch
        %118 = sbr.rel (%p115) target = $region12
      $region11: #{tpu_custom_call.1} parent=5 // pred_region
        %s119 = ssub.s32 %s11, 1
      $region12: #{tpu_custom_call.1} parent=5 // pred_fallthru
        _
      %p120 = scmp.lt.s32.totalorder %s11, 2
      // Predicated region
      $region13: #{tpu_custom_call.1} parent=5 // pred_check
        %p121 = pneg %p120
      $region14: #{tpu_custom_call.1} parent=5 // pred_check_branch
        %123 = sbr.rel (%p121) target = $region16
      $region15: #{tpu_custom_call.1} parent=5 // pred_region
        // Predicated region
        $region17: #{tpu_custom_call.1} parent=15 // pred_check
          %p124 = pneg %p43
        $region18: #{tpu_custom_call.1} parent=15 // pred_check_branch
          %126 = sbr.rel (%p124) target = $region20
        $region19: #{tpu_custom_call.1} parent=15 // pred_region
          %p127 = scmp.lt.s32.totalorder %s18, 1
          %s128 = scalar_select %p127, %s18, 1
          %s129 = smul.addr %s128, 8
          %s130 = smul.addr %s129, 8
          %s131 = scalar_lea.vmem %s0, %s130
        $region20: #{tpu_custom_call.1} parent=15 // pred_fallthru
          _
        // Predicated region
        $region21: #{tpu_custom_call.1} parent=15 // pred_check
          %p132 = pneg %p71
        $region22: #{tpu_custom_call.1} parent=15 // pred_check_branch
          %134 = sbr.rel (%p132) target = $region24
        $region23: #{tpu_custom_call.1} parent=15 // pred_region
          %p135 = scmp.lt.s32.totalorder %s18, 1
          %s136 = scalar_select %p135, %s18, 1
          %p137 = scmp.lt.s32.totalorder %s19, 0
          %s138 = scalar_select %p137, %s19, 0
          %s139 = sadd.s32 %s138, %s136
          %s140 = smul.addr %s139, 8
          %s141 = scalar_lea.vmem %s1, %s140
        $region24: #{tpu_custom_call.1} parent=15 // pred_fallthru
          _
      $region16: #{tpu_custom_call.1} parent=5 // pred_fallthru
        _
      %p142 = scmp.le.s32.totalorder 1, %s11
      %p143 = scmp.lt.s32.totalorder %s11, 3
      %p144 = pnand %p142, %p143
      %p145 = pneg %p144
      // Predicated region
      $region25: #{tpu_custom_call.1} parent=5 // pred_check
        _
      $region26: #{tpu_custom_call.1} parent=5 // pred_check_branch
        %147 = sbr.rel (%p144) target = $region28
      $region27: #{tpu_custom_call.1} parent=5 // pred_region
        %s148 = ssub.s32 %s11, 1
        %p149 = scmp.lt.s32.totalorder %s20, 1
        %s150 = scalar_select %p149, %s20, 1
        %s151 = smul.addr %s150, 8
        %s152 = smul.addr %s151, 8
        %s153 = scalar_lea.vmem %s0, %s152
        %p154 = pneg %p49
        %p155 = pneg %p46
        %p156 = scmp.lt.s32.totalorder %s20, 1
        %s157 = scalar_select %p156, %s20, 1
        %p158 = scmp.lt.s32.totalorder %s21, 0
        %s159 = scalar_select %p158, %s21, 0
        %s160 = sadd.s32 %s159, %s157
        %s161 = smul.addr %s160, 8
        %s162 = scalar_lea.vmem %s1, %s161
        %p163 = pneg %p77
        %p164 = pneg %p74
        %p165 = pneg %p105
        %p166 = pneg %p102
        %s167 = sand.u32 %s92, 1
        %s168 = scalar_lea.sflag [#allocation3], %s167
        %s169 = sand.u32 %s92, 1
        %s170 = smul.addr %s169, 64
        %s171 = scalar_lea.vmem [#allocation2], %s170
        %p172 = scmp.lt.s32.totalorder %s20, 1
        %s173 = scalar_select %p172, %s20, 1
        %s174 = smul.addr %s173, 8
        %s175 = smul.addr %s174, 8
        %s176 = scalar_lea.vmem %s0, %s175
        %p177 = scmp.lt.s32.totalorder %s20, 1
        %s178 = scalar_select %p177, %s20, 1
        %p179 = scmp.lt.s32.totalorder %s21, 0
        %s180 = scalar_select %p179, %s21, 0
        %s181 = sadd.s32 %s180, %s178
        %s182 = smul.addr %s181, 8
        %s183 = scalar_lea.vmem %s1, %s182
        %v184 = vld [vmem:[%s176] sm:$0xff]
        %v185 = vld [vmem:[%s176 + $0x8] sm:$0xff]
        %v186 = vld [vmem:[%s176 + $0x10] sm:$0xff]
        %v187 = vld [vmem:[%s176 + $0x18] sm:$0xff]
        %v188 = vld [vmem:[%s176 + $0x20] sm:$0xff]
        %v189 = vld [vmem:[%s176 + $0x28] sm:$0xff]
        %v190 = vld [vmem:[%s176 + $0x30] sm:$0xff]
        %v191 = vld [vmem:[%s176 + $0x38] sm:$0xff]
        %v192 = vld [vmem:[%s183] sm:$0xff]
        %vm193 = vcmask 64512
        %v195 = vsel %vm193, %v184, 0
        %v198 = vsel %vm193, %v185, 0
        %v201 = vsel %vm193, %v186, 0
        %v204 = vsel %vm193, %v187, 0
        %v207 = vsel %vm193, %v188, 0
        %v210 = vsel %vm193, %v189, 0
        %v213 = vsel %vm193, %v190, 0
        %v216 = vsel %vm193, %v191, 0
        %218 = vmatprep.subr.mxu0 0.0
        %219 = vmatpush1.msra.mxu0 %v192
        %220 = vmatprep.subr.mxu0 0.0
        %221 = vmatpush1.msra.mxu0 0.0
        %222 = vmatprep.subr.mxu0 0.0
        %223 = vmatpush1.msra.mxu0 0.0
        %224 = vmatprep.subr.mxu0 0.0
        %225 = vmatpush1.msra.mxu0 0.0
        %226 = vmatprep.subr.mxu0 0.0
        %227 = vmatpush1.msra.mxu0 0.0
        %228 = vmatprep.subr.mxu0 0.0
        %229 = vmatpush1.msra.mxu0 0.0
        %230 = vmatprep.subr.mxu0 0.0
        %231 = vmatpush1.msra.mxu0 0.0
        %232 = vmatprep.subr.mxu0 0.0
        %233 = vmatpush1.msra.mxu0 0.0
        %234 = vmatprep.subr.mxu0 0.0
        %235 = vmatpush1.msra.mxu0 0.0
        %236 = vmatprep.subr.mxu0 0.0
        %237 = vmatpush1.msra.mxu0 0.0
        %238 = vmatprep.subr.mxu0 0.0
        %239 = vmatpush1.msra.mxu0 0.0
        %240 = vmatprep.subr.mxu0 0.0
        %241 = vmatpush1.msra.mxu0 0.0
        %242 = vmatprep.subr.mxu0 0.0
        %243 = vmatpush1.msra.mxu0 0.0
        %244 = vmatprep.subr.mxu0 0.0
        %245 = vmatpush1.msra.mxu0 0.0
        %246 = vmatprep.subr.mxu0 0.0
        %247 = vmatpush1.msra.mxu0 0.0
        %248 = vmatprep.subr.mxu0 0.0
        %249 = vmatpush1.msra.mxu0 0.0
        %250 = vmatprep.subr.mxu0 0.0
        %251 = vmatpush1.msra.mxu0 0.0
        %252 = vmatprep.subr.mxu0 0.0
        %253 = vmatpush1.msra.mxu0 0.0
        %254 = vmatprep.subr.mxu0 0.0
        %255 = vmatpush1.msra.mxu0 0.0
        %256 = vmatprep.subr.mxu0 0.0
        %257 = vmatpush1.msra.mxu0 0.0
        %258 = vmatprep.subr.mxu0 0.0
        %259 = vmatpush1.msra.mxu0 0.0
        %260 = vmatprep.subr.mxu0 0.0
        %261 = vmatpush1.msra.mxu0 0.0
        %262 = vmatprep.subr.mxu0 0.0
        %263 = vmatpush1.msra.mxu0 0.0
        %264 = vmatprep.subr.mxu0 0.0
        %265 = vmatpush1.msra.mxu0 0.0
        %266 = vmatprep.subr.mxu0 0.0
        %267 = vmatpush1.msra.mxu0 0.0
        %268 = vmatprep.subr.mxu0 0.0
        %269 = vmatpush1.msra.mxu0 0.0
        %270 = vmatprep.subr.mxu0 0.0
        %271 = vmatpush1.msra.mxu0 0.0
        %272 = vmatprep.subr.mxu0 0.0
        %273 = vmatpush1.msra.mxu0 0.0
        %274 = vmatprep.subr.mxu0 0.0
        %275 = vmatpush1.msra.mxu0 0.0
        %276 = vmatprep.subr.mxu0 0.0
        %277 = vmatpush1.msra.mxu0 0.0
        %278 = vmatprep.subr.mxu0 0.0
        %279 = vmatpush1.msra.mxu0 0.0
        %280 = vmatprep.subr.mxu0 0.0
        %281 = vmatpush1.msra.mxu0 0.0
        %282 = vmatprep.mubr.f32.mxu0 0.0
        %283 = vmatmul.mubr.f32.gmra.mrb[0].mxu0 %v195
        %v284 = vpop.f32.mrb[0].mxu0
        %v285 = vadd.f32 0.0, %v284
        %v286 = vpop.f32.mrb[0].mxu0
        %287 = vmatprep.mubr.f32.mxu0 0.0
        %288 = vmatmul.mubr.f32.gmra.mrb[0].mxu0 %v198
        %v289 = vpop.f32.mrb[0].mxu0
        %v290 = vadd.f32 0.0, %v289
        %v291 = vpop.f32.mrb[0].mxu0
        %292 = vmatprep.mubr.f32.mxu0 0.0
        %293 = vmatmul.mubr.f32.gmra.mrb[0].mxu0 %v201
        %v294 = vpop.f32.mrb[0].mxu0
        %v295 = vadd.f32 0.0, %v294
        %v296 = vpop.f32.mrb[0].mxu0
        %297 = vmatprep.mubr.f32.mxu0 0.0
        %298 = vmatmul.mubr.f32.gmra.mrb[0].mxu0 %v204
        %v299 = vpop.f32.mrb[0].mxu0
        %v300 = vadd.f32 0.0, %v299
        %v301 = vpop.f32.mrb[0].mxu0
        %302 = vmatprep.mubr.f32.mxu0 0.0
        %303 = vmatmul.mubr.f32.gmra.mrb[0].mxu0 %v207
        %v304 = vpop.f32.mrb[0].mxu0
        %v305 = vadd.f32 0.0, %v304
        %v306 = vpop.f32.mrb[0].mxu0
        %307 = vmatprep.mubr.f32.mxu0 0.0
        %308 = vmatmul.mubr.f32.gmra.mrb[0].mxu0 %v210
        %v309 = vpop.f32.mrb[0].mxu0
        %v310 = vadd.f32 0.0, %v309
        %v311 = vpop.f32.mrb[0].mxu0
        %312 = vmatprep.mubr.f32.mxu0 0.0
        %313 = vmatmul.mubr.f32.gmra.mrb[0].mxu0 %v213
        %v314 = vpop.f32.mrb[0].mxu0
        %v315 = vadd.f32 0.0, %v314
        %v316 = vpop.f32.mrb[0].mxu0
        %317 = vmatprep.mubr.f32.mxu0 0.0
        %318 = vmatmul.mubr.f32.gmra.mrb[0].mxu0 %v216
        %v319 = vpop.f32.mrb[0].mxu0
        %v320 = vadd.f32 0.0, %v319
        %v321 = vpop.f32.mrb[0].mxu0
        %322 = vdwg.mxu0
        %v323 = vmax.f32 %v285, 0.0
        %v324 = vmax.f32 %v290, 0.0
        %v325 = vmax.f32 %v295, 0.0
        %v326 = vmax.f32 %v300, 0.0
        %v327 = vmax.f32 %v305, 0.0
        %v328 = vmax.f32 %v310, 0.0
        %v329 = vmax.f32 %v315, 0.0
        %v330 = vmax.f32 %v320, 0.0
        %v331 = vmul.f32 %v323, %v323
        %v332 = vmul.f32 %v324, %v324
        %v333 = vmul.f32 %v325, %v325
        %v334 = vmul.f32 %v326, %v326
        %v335 = vmul.f32 %v327, %v327
        %v336 = vmul.f32 %v328, %v328
        %v337 = vmul.f32 %v329, %v329
        %v338 = vmul.f32 %v330, %v330
        %vm339 = vcmask 523264
        %v340 = vsel %vm339, %v331, 0.0
        %v341 = vsel %vm339, %v332, 0.0
        %v342 = vadd.f32 %v340, %v341
        %v343 = vsel %vm339, %v333, 0.0
        %v344 = vadd.f32 %v342, %v343
        %v345 = vsel %vm339, %v334, 0.0
        %v346 = vadd.f32 %v344, %v345
        %v347 = vsel %vm339, %v335, 0.0
        %v348 = vadd.f32 %v346, %v347
        %v349 = vsel %vm339, %v336, 0.0
        %v350 = vadd.f32 %v348, %v349
        %v351 = vsel %vm339, %v337, 0.0
        %v352 = vadd.f32 %v350, %v351
        %v353 = vsel %vm339, %v338, 0.0
        %v354 = vadd.f32 %v352, %v353
        %v355 = vrot.slane %v354, 4
        %v356 = vadd.f32 %v354, %v355
        %v357 = vrot.slane %v356, 2
        %v358 = vadd.f32 %v356, %v357
        %v359 = vrot.slane %v358, 1
        %v360 = vadd.f32 %v358, %v359
        %v361 = vadd.f32 %v360, 1e-06
        %v362 = vrsqrt.pop %v361
        %v363 = vmul.f32 %v323, %v362
        %v364 = vmul.f32 %v324, %v362
        %v365 = vmul.f32 %v325, %v362
        %v366 = vmul.f32 %v326, %v362
        %v367 = vmul.f32 %v327, %v362
        %v368 = vmul.f32 %v328, %v362
        %v369 = vmul.f32 %v329, %v362
        %v370 = vmul.f32 %v330, %v362
        %371 = vst.msk [vmem:[%s171] sm:$0xff] %vm339, %v363
        %372 = vst.msk [vmem:[%s171 + $0x8] sm:$0xff] %vm339, %v364
        %373 = vst.msk [vmem:[%s171 + $0x10] sm:$0xff] %vm339, %v365
        %374 = vst.msk [vmem:[%s171 + $0x18] sm:$0xff] %vm339, %v366
        %375 = vst.msk [vmem:[%s171 + $0x20] sm:$0xff] %vm339, %v367
        %376 = vst.msk [vmem:[%s171 + $0x28] sm:$0xff] %vm339, %v368
        %377 = vst.msk [vmem:[%s171 + $0x30] sm:$0xff] %vm339, %v369
        %378 = vst.msk [vmem:[%s171 + $0x38] sm:$0xff] %vm339, %v370
        %s379 = sand.u32 %s92, 1
        %s380 = scalar_lea.sflag [#allocation3], %s379
        %s381 = sand.u32 %s92, 1
        %s382 = smul.addr %s381, 64
        %s383 = scalar_lea.vmem [#allocation2], %s382
        // Predicated region
        $region29: #{tpu_custom_call.1} parent=27 // pred_check
          %p384 = pneg %p102
        $region30: #{tpu_custom_call.1} parent=27 // pred_check_branch
          %386 = sbr.rel (%p384) target = $region32
        $region31: #{tpu_custom_call.1} parent=27 // pred_region
          %s388 = ssub.s32 1024, 1024
          %389 = vsyncadd %s380, %s388
          %s390 = smul.addr %s20, 8
          %s391 = sadd.s32 %s21, %s390
          %s392 = smul.addr %s391, 128
          %s393 = scalar_lea.hbm %s2, %s392
          %s394 = sshll.u32 %s383, 4
          %s395 = int_to_ptr.vmem [resolvable:$true] %s394
          %400 = dma.vmem_to_hbm [thread:$0]  %s395, 1024, %s393, %s380, 128, 128, 8
        $region32: #{tpu_custom_call.1} parent=27 // pred_fallthru
          _
      $region28: #{tpu_custom_call.1} parent=5 // pred_fallthru
        _
      %p401 = scmp.le.s32.totalorder 2, %s11
      // Predicated region
      $region33: #{tpu_custom_call.1} parent=5 // pred_check
        %p402 = pneg %p401
      $region34: #{tpu_custom_call.1} parent=5 // pred_check_branch
        %404 = sbr.rel (%p402) target = $region36
      $region35: #{tpu_custom_call.1} parent=5 // pred_region
        %s405 = ssub.s32 %s11, 2
        // Predicated region
        $region37: #{tpu_custom_call.1} parent=35 // pred_check
          %p406 = pneg %p108
        $region38: #{tpu_custom_call.1} parent=35 // pred_check_branch
          %408 = sbr.rel (%p406) target = $region40
        $region39: #{tpu_custom_call.1} parent=35 // pred_region
          %s409 = sand.u32 %s93, 1
          %s410 = scalar_lea.sflag [#allocation3], %s409
          %s411 = sand.u32 %s93, 1
          %s412 = smul.addr %s411, 64
          %s413 = scalar_lea.vmem [#allocation2], %s412
          %414 = dma.done %s410, 1024
        $region40: #{tpu_custom_call.1} parent=35 // pred_fallthru
          _
      $region36: #{tpu_custom_call.1} parent=5 // pred_fallthru
        _
    $region6: #{tpu_custom_call.1} parent=1 // loop_footer
      %s15 = sadd.s32 1, %s11
    $region7: #{tpu_custom_call.1} parent=1 // loop_footer_branch
      %10 = sbr.rel target = $region3
    $region8: #{tpu_custom_call.1} parent=1 // loop_exit
      _
    %415 = vsyncpa [#allocation3], 1
    %s416 = scalar_lea.sflag [#allocation3], 1
    %417 = vsyncpa %s416, 1

</llo_original>
